<compile_context>
chip_gen: v5e
topology: v5e:2x2
jax: 0.10.0
libtpu: 0.0.40
codegen_flags: <defaults>
</compile_context>

<pallas_src>
import math
import functools

import jax
import jax.numpy as jnp
from jax.experimental import pallas as pl
from jax.experimental.pallas import tpu as pltpu

_NEG = -1e30      # finite "-inf": exp underflows to 0, no inf-inf NaN risk
_LANE = 128


def _cosface_ce_kernel(x_ref, xn_ref, w_ref, wn_ref, lab_ref, o_ref,
                       m_sc, l_sc, t_sc,
                       *, s, m, eps, num_classes, tile_c, mask_pad):
    """Grid = (b_tile, c_tile); c is the reduction ('arbitrary') axis."""
    c = pl.program_id(1)
    nc = pl.num_programs(1)

    @pl.when(c == 0)
    def _init():
        m_sc[...] = jnp.full_like(m_sc, _NEG)
        l_sc[...] = jnp.zeros_like(l_sc)
        t_sc[...] = jnp.zeros_like(t_sc)

    # MXU matmul: bf16 operands, f32 accumulation.  Weight tile is already
    # (D, TC) so the class axis is lane-dense and no transpose is needed.
    ip = jnp.dot(x_ref[...], w_ref[...],
                 preferred_element_type=jnp.float32)        # (TB, TC)

    # cosine = ip / clamp(|x|*|w|, eps); both norms precomputed in f32.
    denom = jnp.maximum(xn_ref[...] * wn_ref[...], eps)     # (TB, TC)
    cosine = ip * pl.reciprocal(denom, approx=False)

    # Margin + target extraction via global-column compare (no one-hot).
    col = c * tile_c + jax.lax.broadcasted_iota(jnp.int32, cosine.shape, 1)
    is_tgt = col == lab_ref[...]                             # (TB, TC)

    logits = s * cosine - jnp.where(is_tgt, s * m, 0.0)
    if mask_pad:  # static: only traced when C % TC != 0 (padded classes exist)
        logits = jnp.where(col < num_classes, logits, _NEG)

    # Online logsumexp accumulation across C tiles.
    m_prev = m_sc[...]
    m_new = jnp.maximum(m_prev, jnp.max(logits, axis=1, keepdims=True))
    alpha = jnp.exp(m_prev - m_new)
    l_sc[...] = alpha * l_sc[...] + jnp.sum(jnp.exp(logits - m_new),
                                            axis=1, keepdims=True)
    m_sc[...] = m_new
    t_sc[...] = t_sc[...] + jnp.sum(jnp.where(is_tgt, logits, 0.0),
                                    axis=1, keepdims=True)

    @pl.when(c == nc - 1)
    def _finalize():
        row_loss = m_sc[...] + jnp.log(l_sc[...]) - t_sc[...]   # (TB, 1)
        # Lane-broadcast so the store is lane-dense (unmasked vst).
        o_ref[...] = jnp.broadcast_to(row_loss, o_ref.shape)


def _round_up(a, b):
    return (a + b - 1) // b * b


def margin_cosine_product_loss(x, weight, label, *, s=30.0, m=0.4, eps=1e-8,
                               tb_max=256, tc_max=2048):
    """x: (B, D) f32, weight: (C, D) f32, label: (B,) int.  Returns scalar f32."""
    B, D = x.shape
    C, D2 = weight.shape
    assert D == D2

    # TB rows per MXU pass (multiple of 8), TC classes per tile (multiple of
    # 128, lane-dense).  Sized well under the 32 MiB scoped VMEM budget even
    # with double-buffered weight tiles.
    TB = min(tb_max, _round_up(B, 8))
    B_pad = _round_up(B, TB)
    TC = min(tc_max, _round_up(C, _LANE))
    C_pad = _round_up(C, TC)
    D_pad = _round_up(D, _LANE)

    f32, bf16 = jnp.float32, jnp.bfloat16
    x_f32 = x.astype(f32)
    w_f32 = weight.astype(f32)

    # Norms hoisted to the wrapper (computed once, f32, exact); matmul
    # operands stored bf16 in HBM (half the DMA traffic), W pre-transposed.
    x_bf = jnp.zeros((B_pad, D_pad), bf16).at[:B, :D].set(x_f32.astype(bf16))
    x_norm = jnp.zeros((B_pad, 1), f32).at[:B, 0].set(
        jnp.sqrt(jnp.sum(x_f32 * x_f32, axis=1)))
    w_t = jnp.zeros((D_pad, C_pad), bf16).at[:D, :C].set(w_f32.T.astype(bf16))
    w_norm = jnp.zeros((1, C_pad), f32).at[0, :C].set(
        jnp.sqrt(jnp.sum(w_f32 * w_f32, axis=1)))
    lab_p = jnp.zeros((B_pad, 1), jnp.int32).at[:B, 0].set(label.astype(jnp.int32))

    nb, nc = B_pad // TB, C_pad // TC

    kernel = functools.partial(
        _cosface_ce_kernel, s=float(s), m=float(m), eps=float(eps),
        num_classes=C, tile_c=TC, mask_pad=(C_pad != C))

    row_loss = pl.pallas_call(
        kernel,
        out_shape=jax.ShapeDtypeStruct((B_pad, _LANE), f32),
        grid_spec=pltpu.PrefetchScalarGridSpec(
            num_scalar_prefetch=0,
            grid=(nb, nc),
            in_specs=[
                pl.BlockSpec((TB, D_pad), lambda b, c: (b, 0)),   # x (bf16)
                pl.BlockSpec((TB, 1),     lambda b, c: (b, 0)),   # |x| per row
                pl.BlockSpec((D_pad, TC), lambda b, c: (0, c)),   # W^T (bf16)
                pl.BlockSpec((1, TC),     lambda b, c: (0, c)),   # |w| per class
                pl.BlockSpec((TB, 1),     lambda b, c: (b, 0)),   # labels
            ],
            out_specs=pl.BlockSpec((TB, _LANE), lambda b, c: (b, 0)),
            scratch_shapes=[
                pltpu.VMEM((TB, 1), f32),   # running max
                pltpu.VMEM((TB, 1), f32),   # running sum-exp
                pltpu.VMEM((TB, 1), f32),   # target logit
            ],
        ),
        compiler_params=pltpu.CompilerParams(
            dimension_semantics=("parallel", "arbitrary"),
            vmem_limit_bytes=32 * 1024 * 1024,
        ),
    )(x_bf, x_norm, w_t, w_norm, lab_p)

    return jnp.mean(row_loss[:B, 0])


def xavier_uniform(key, shape, dtype=jnp.float32):
    fan_out, fan_in = shape
    bound = math.sqrt(6.0 / (fan_in + fan_out))
    return jax.random.uniform(key, shape, dtype=dtype, minval=-bound, maxval=bound)


if __name__ == "__main__":
    # Small deterministic example: batch=8, in_features=32, out_features=16.
    B, IN_FEATURES, OUT_FEATURES = 8, 32, 16
    key = jax.random.PRNGKey(0)
    kx, kw, kl = jax.random.split(key, 3)

    x = jax.random.normal(kx, (B, IN_FEATURES), dtype=jnp.float32)
    weight = xavier_uniform(kw, (OUT_FEATURES, IN_FEATURES))
    label = jax.random.randint(kl, (B,), 0, OUT_FEATURES, dtype=jnp.int32)

    loss = margin_cosine_product_loss(x, weight, label, s=30.0, m=0.4)
    jax.block_until_ready(loss)

    # Plain-JAX reference mirroring the kernel's precision choices
    # (bf16 MXU operands, f32 norms / softmax).
    ip = jnp.dot(x.astype(jnp.bfloat16), weight.T.astype(jnp.bfloat16),
                 preferred_element_type=jnp.float32)
    denom = jnp.maximum(
        jnp.linalg.norm(x, axis=1, keepdims=True)
        * jnp.linalg.norm(weight, axis=1, keepdims=True).T, 1e-8)
    cosine = ip / denom
    one_hot = jax.nn.one_hot(label, OUT_FEATURES, dtype=jnp.float32)
    logits = 30.0 * (cosine - one_hot * 0.4)
    ref = jnp.mean(jax.nn.logsumexp(logits, axis=1)
                   - jnp.sum(logits * one_hot, axis=1))
    assert jnp.allclose(loss, ref, rtol=1e-4, atol=1e-4), (loss, ref)

    print("KERNEL_OK")
</pallas_src>

<mosaic_0001>
module attributes {stable_mosaic.version = 11 : i64} {
  func.func @_cosface_ce_kernel(%arg0: i32, %arg1: i32, %arg2: memref<8x128xbf16, #tpu.memory_space<vmem>>, %arg3: memref<8x1xf32, #tpu.memory_space<vmem>>, %arg4: memref<128x128xbf16, #tpu.memory_space<vmem>>, %arg5: memref<1x128xf32, #tpu.memory_space<vmem>>, %arg6: memref<8x1xi32, #tpu.memory_space<vmem>>, %arg7: memref<8x128xf32, #tpu.memory_space<vmem>>, %arg8: memref<8x1xf32, #tpu.memory_space<vmem>>, %arg9: memref<8x1xf32, #tpu.memory_space<vmem>>, %arg10: memref<8x1xf32, #tpu.memory_space<vmem>>) attributes {dimension_semantics = [#tpu.dimension_semantics<parallel>, #tpu.dimension_semantics<arbitrary>], iteration_bounds = array<i64: 1, 1>, scalar_prefetch = 0 : i64, scratch_operands = 3 : i64, tpu.core_type = #tpu.core_type<tc>, window_params = [{transform_indices = @transform_0, window_bounds = array<i64: 8, 128>}, {transform_indices = @transform_1, window_bounds = array<i64: 8, 1>}, {transform_indices = @transform_2, window_bounds = array<i64: 128, 128>}, {transform_indices = @transform_3, window_bounds = array<i64: 1, 128>}, {transform_indices = @transform_4, window_bounds = array<i64: 8, 1>}, {transform_indices = @transform_5, window_bounds = array<i64: 8, 128>}]} {
    %c0_i32 = arith.constant 0 : i32
    %0 = arith.cmpi eq, %arg1, %c0_i32 : i32
    %1 = arith.extui %0 : i1 to i32
    %c0_i32_0 = arith.constant 0 : i32
    %2 = arith.cmpi ne, %1, %c0_i32_0 : i32
    scf.if %2 {
      %cst_33 = arith.constant -1.000000e+30 : f32
      %58 = vector.broadcast %cst_33 : f32 to vector<8x1xf32>
      %c0_34 = arith.constant 0 : index
      %c0_35 = arith.constant 0 : index
      %59 = vector.load %arg8[%c0_34, %c0_35] : memref<8x1xf32, #tpu.memory_space<vmem>>, vector<8x1xf32>
      tpu.vector_store %arg8[%c0_34, %c0_35], %58 {strides = array<i32>} : memref<8x1xf32, #tpu.memory_space<vmem>>, vector<8x1xf32>,
      %cst_36 = arith.constant 0.000000e+00 : f32
      %60 = vector.broadcast %cst_36 : f32 to vector<8x1xf32>
      %c0_37 = arith.constant 0 : index
      %c0_38 = arith.constant 0 : index
      %61 = vector.load %arg9[%c0_37, %c0_38] : memref<8x1xf32, #tpu.memory_space<vmem>>, vector<8x1xf32>
      tpu.vector_store %arg9[%c0_37, %c0_38], %60 {strides = array<i32>} : memref<8x1xf32, #tpu.memory_space<vmem>>, vector<8x1xf32>,
      %cst_39 = arith.constant 0.000000e+00 : f32
      %62 = vector.broadcast %cst_39 : f32 to vector<8x1xf32>
      %c0_40 = arith.constant 0 : index
      %c0_41 = arith.constant 0 : index
      %63 = vector.load %arg10[%c0_40, %c0_41] : memref<8x1xf32, #tpu.memory_space<vmem>>, vector<8x1xf32>
      tpu.vector_store %arg10[%c0_40, %c0_41], %62 {strides = array<i32>} : memref<8x1xf32, #tpu.memory_space<vmem>>, vector<8x1xf32>,
    } else {
    }
    %c0 = arith.constant 0 : index
    %c0_1 = arith.constant 0 : index
    %3 = vector.load %arg2[%c0, %c0_1] : memref<8x128xbf16, #tpu.memory_space<vmem>>, vector<8x128xbf16>
    %c0_2 = arith.constant 0 : index
    %c0_3 = arith.constant 0 : index
    %4 = vector.load %arg4[%c0_2, %c0_3] : memref<128x128xbf16, #tpu.memory_space<vmem>>, vector<128x128xbf16>
    %cst = arith.constant dense<0.000000e+00> : vector<8x128xf32>
    %5 = tpu.matmul %3, %4, %cst {dimension_numbers = #tpu.dot_dimension_numbers<[1], [0], [0], [1], [0, 0, 1, 1], [], []>} : vector<8x128xbf16>, vector<128x128xbf16>, vector<8x128xf32> -> vector<8x128xf32>
    %c0_4 = arith.constant 0 : index
    %c0_5 = arith.constant 0 : index
    %6 = vector.load %arg3[%c0_4, %c0_5] : memref<8x1xf32, #tpu.memory_space<vmem>>, vector<8x1xf32>
    %c0_6 = arith.constant 0 : index
    %c0_7 = arith.constant 0 : index
    %7 = vector.load %arg5[%c0_6, %c0_7] : memref<1x128xf32, #tpu.memory_space<vmem>>, vector<1x128xf32>
    %8 = vector.broadcast %6 : vector<8x1xf32> to vector<8x128xf32>
    %9 = vector.broadcast %7 : vector<1x128xf32> to vector<8x128xf32>
    %10 = arith.mulf %8, %9 : vector<8x128xf32>
    %cst_8 = arith.constant 9.99999993E-9 : f32
    %11 = vector.broadcast %cst_8 : f32 to vector<8x128xf32>
    %12 = arith.maximumf %10, %11 : vector<8x128xf32>
    %13 = tpu.reciprocal %12 : vector<8x128xf32> -> vector<8x128xf32>
    %14 = arith.mulf %5, %13 : vector<8x128xf32>
    %c128_i32 = arith.constant 128 : i32
    %15 = arith.muli %arg1, %c128_i32 : i32
    %16 = tpu.iota {dimensions = array<i32: 1>} : vector<8x128xi32>
    %17 = vector.broadcast %15 : i32 to vector<8x128xi32>
    %18 = arith.addi %17, %16 : vector<8x128xi32>
    %c0_9 = arith.constant 0 : index
    %c0_10 = arith.constant 0 : index
    %19 = vector.load %arg6[%c0_9, %c0_10] : memref<8x1xi32, #tpu.memory_space<vmem>>, vector<8x1xi32>
    %20 = vector.broadcast %19 : vector<8x1xi32> to vector<8x128xi32>
    %21 = arith.cmpi eq, %18, %20 : vector<8x128xi32>
    %cst_11 = arith.constant 3.000000e+01 : f32
    %22 = vector.broadcast %cst_11 : f32 to vector<8x128xf32>
    %23 = arith.mulf %22, %14 : vector<8x128xf32>
    %cst_12 = arith.constant 1.200000e+01 : f32
    %cst_13 = arith.constant 0.000000e+00 : f32
    %24 = vector.broadcast %cst_12 : f32 to vector<8x128xf32>
    %25 = vector.broadcast %cst_13 : f32 to vector<8x128xf32>
    %26 = arith.select %21, %24, %25 : vector<8x128xi1>, vector<8x128xf32>
    %27 = arith.subf %23, %26 : vector<8x128xf32>
    %c16_i32 = arith.constant 16 : i32
    %28 = vector.broadcast %c16_i32 : i32 to vector<8x128xi32>
    %29 = arith.cmpi slt, %18, %28 : vector<8x128xi32>
    %cst_14 = arith.constant -1.000000e+30 : f32
    %30 = vector.broadcast %cst_14 : f32 to vector<8x128xf32>
    %31 = arith.select %29, %27, %30 : vector<8x128xi1>, vector<8x128xf32>
    %c0_15 = arith.constant 0 : index
    %c0_16 = arith.constant 0 : index
    %32 = vector.load %arg8[%c0_15, %c0_16] : memref<8x1xf32, #tpu.memory_space<vmem>>, vector<8x1xf32>
    %cst_17 = arith.constant dense<0xFF800000> : vector<8xf32>
    %33 = vector.multi_reduction <maximumf>, %31, %cst_17 [1] : vector<8x128xf32> to vector<8xf32>
    %34 = vector.shape_cast %33 : vector<8xf32> to vector<8x1xf32>
    %35 = arith.maximumf %32, %34 : vector<8x1xf32>
    %36 = arith.subf %32, %35 : vector<8x1xf32>
    %37 = math.exp %36 : vector<8x1xf32>
    %c0_18 = arith.constant 0 : index
    %c0_19 = arith.constant 0 : index
    %38 = vector.load %arg9[%c0_18, %c0_19] : memref<8x1xf32, #tpu.memory_space<vmem>>, vector<8x1xf32>
    %39 = arith.mulf %37, %38 : vector<8x1xf32>
    %40 = vector.broadcast %35 : vector<8x1xf32> to vector<8x128xf32>
    %41 = arith.subf %31, %40 : vector<8x128xf32>
    %42 = math.exp %41 : vector<8x128xf32>
    %cst_20 = arith.constant dense<0.000000e+00> : vector<8xf32>
    %43 = vector.multi_reduction <add>, %42, %cst_20 [1] : vector<8x128xf32> to vector<8xf32>
    %44 = vector.shape_cast %43 : vector<8xf32> to vector<8x1xf32>
    %45 = arith.addf %39, %44 : vector<8x1xf32>
    %c0_21 = arith.constant 0 : index
    %c0_22 = arith.constant 0 : index
    %46 = vector.load %arg9[%c0_21, %c0_22] : memref<8x1xf32, #tpu.memory_space<vmem>>, vector<8x1xf32>
    tpu.vector_store %arg9[%c0_21, %c0_22], %45 {strides = array<i32>} : memref<8x1xf32, #tpu.memory_space<vmem>>, vector<8x1xf32>,
    %c0_23 = arith.constant 0 : index
    %c0_24 = arith.constant 0 : index
    %47 = vector.load %arg8[%c0_23, %c0_24] : memref<8x1xf32, #tpu.memory_space<vmem>>, vector<8x1xf32>
    tpu.vector_store %arg8[%c0_23, %c0_24], %35 {strides = array<i32>} : memref<8x1xf32, #tpu.memory_space<vmem>>, vector<8x1xf32>,
    %c0_25 = arith.constant 0 : index
    %c0_26 = arith.constant 0 : index
    %48 = vector.load %arg10[%c0_25, %c0_26] : memref<8x1xf32, #tpu.memory_space<vmem>>, vector<8x1xf32>
    %cst_27 = arith.constant 0.000000e+00 : f32
    %49 = vector.broadcast %cst_27 : f32 to vector<8x128xf32>
    %50 = arith.select %21, %31, %49 : vector<8x128xi1>, vector<8x128xf32>
    %cst_28 = arith.constant dense<0.000000e+00> : vector<8xf32>
    %51 = vector.multi_reduction <add>, %50, %cst_28 [1] : vector<8x128xf32> to vector<8xf32>
    %52 = vector.shape_cast %51 : vector<8xf32> to vector<8x1xf32>
    %53 = arith.addf %48, %52 : vector<8x1xf32>
    %c0_29 = arith.constant 0 : index
    %c0_30 = arith.constant 0 : index
    %54 = vector.load %arg10[%c0_29, %c0_30] : memref<8x1xf32, #tpu.memory_space<vmem>>, vector<8x1xf32>
    tpu.vector_store %arg10[%c0_29, %c0_30], %53 {strides = array<i32>} : memref<8x1xf32, #tpu.memory_space<vmem>>, vector<8x1xf32>,
    %c0_i32_31 = arith.constant 0 : i32
    %55 = arith.cmpi eq, %arg1, %c0_i32_31 : i32
    %56 = arith.extui %55 : i1 to i32
    %c0_i32_32 = arith.constant 0 : i32
    %57 = arith.cmpi ne, %56, %c0_i32_32 : i32
    scf.if %57 {
      %c0_33 = arith.constant 0 : index
      %c0_34 = arith.constant 0 : index
      %58 = vector.load %arg8[%c0_33, %c0_34] : memref<8x1xf32, #tpu.memory_space<vmem>>, vector<8x1xf32>
      %c0_35 = arith.constant 0 : index
      %c0_36 = arith.constant 0 : index
      %59 = vector.load %arg9[%c0_35, %c0_36] : memref<8x1xf32, #tpu.memory_space<vmem>>, vector<8x1xf32>
      %60 = math.log %59 : vector<8x1xf32>
      %61 = arith.addf %58, %60 : vector<8x1xf32>
      %c0_37 = arith.constant 0 : index
      %c0_38 = arith.constant 0 : index
      %62 = vector.load %arg10[%c0_37, %c0_38] : memref<8x1xf32, #tpu.memory_space<vmem>>, vector<8x1xf32>
      %63 = arith.subf %61, %62 : vector<8x1xf32>
      %64 = vector.shape_cast %63 : vector<8x1xf32> to vector<8x1xf32>
      %65 = vector.broadcast %64 : vector<8x1xf32> to vector<8x128xf32>
      %c0_39 = arith.constant 0 : index
      %c0_40 = arith.constant 0 : index
      %66 = vector.load %arg7[%c0_39, %c0_40] : memref<8x128xf32, #tpu.memory_space<vmem>>, vector<8x128xf32>
      tpu.vector_store %arg7[%c0_39, %c0_40], %65 {strides = array<i32>} : memref<8x128xf32, #tpu.memory_space<vmem>>, vector<8x128xf32>,
    } else {
    }
    return
  }
  func.func @transform_0(%arg0: i32, %arg1: i32) -> (i32, i32) {
    %c0_i32 = arith.constant 0 : i32
    %c0_i32_0 = arith.constant 0 : i32
    return %arg0, %c0_i32 : i32, i32
  }
  func.func @transform_1(%arg0: i32, %arg1: i32) -> (i32, i32) {
    %c0_i32 = arith.constant 0 : i32
    %c0_i32_0 = arith.constant 0 : i32
    return %arg0, %c0_i32 : i32, i32
  }
  func.func @transform_2(%arg0: i32, %arg1: i32) -> (i32, i32) {
    %c0_i32 = arith.constant 0 : i32
    %c0_i32_0 = arith.constant 0 : i32
    return %c0_i32, %arg1 : i32, i32
  }
  func.func @transform_3(%arg0: i32, %arg1: i32) -> (i32, i32) {
    %c0_i32 = arith.constant 0 : i32
    %c0_i32_0 = arith.constant 0 : i32
    return %c0_i32, %arg1 : i32, i32
  }
  func.func @transform_4(%arg0: i32, %arg1: i32) -> (i32, i32) {
    %c0_i32 = arith.constant 0 : i32
    %c0_i32_0 = arith.constant 0 : i32
    return %arg0, %c0_i32 : i32, i32
  }
  func.func @transform_5(%arg0: i32, %arg1: i32) -> (i32, i32) {
    %c0_i32 = arith.constant 0 : i32
    %c0_i32_0 = arith.constant 0 : i32
    return %arg0, %c0_i32 : i32, i32
  }
}

</mosaic_0001>

<llo_original>
// kernel: tpu_custom_call.1
$region0: #{tpu_custom_call.1}
  #allocation0 [shape = 'u32[]', space=smem, size = 0x4, offset = 0x4, fixed_abs, tag = 'smem constant byte address 0x4 - core index']
  #allocation1 [shape = 'u32[72,128]{1,0:T(1,128)}', space=vmem, size = 0x9000, scoped, tag = 'internal scratch']
  #allocation2 [shape = 'f32[8,1]{1,0:T(8,128)}', space=vmem, size = 0x1000, scoped, tag = 'scratch operand']
  #allocation3 [shape = 'f32[8,1]{1,0:T(8,128)}', space=vmem, size = 0x1000, scoped, tag = 'scratch operand']
  #allocation4 [shape = 'f32[8,1]{1,0:T(8,128)}', space=vmem, size = 0x1000, scoped, tag = 'scratch operand']
  %s0 = inlined_call_operand.vmem [shape: bf16[8,128], index: 0, kind: input, shape index: {}]
  %s1 = inlined_call_operand.vmem [shape: f32[8,1], index: 1, kind: input, shape index: {}]
  %s2 = inlined_call_operand.hbm [shape: bf16[128,128], index: 2, kind: input, shape index: {}]
  %s3 = inlined_call_operand.vmem [shape: f32[1,128], index: 3, kind: input, shape index: {}]
  %s4 = inlined_call_operand.vmem [shape: s32[8,1], index: 4, kind: input, shape index: {}]
  %s5 = inlined_call_operand.hbm [shape: f32[8,128], index: 5, kind: output, shape index: {}]
  %s6 = sld [smem:[#allocation0]]
  $region42: #{tpu_custom_call.1} parent=0
    _
  %s8 = ssub.s32 1, %s6
  %s9 = scalar_select 0, %s8, %s6
  $region1: #{tpu_custom_call.1} parent=0
    #allocation5 [shape = 'u8[32768]{0}', space=vmem, size = 0x8000, scoped, tag = 'input window, operand 2, single buffered']
    #allocation6 [shape = 's32[1]{0}', space=sflag, size = 0x4, scoped, tag = 'scoped memory for tpu_custom_call.1']
    #allocation7 [shape = 's32[1]{0}', space=sflag, size = 0x4, scoped, tag = 'scoped memory for tpu_custom_call.1']
    #allocation8 [shape = 'u8[4096]{0}', space=vmem, size = 0x1000, scoped, tag = 'output window, operand 0, single buffered']
    %10 = vsyncpa [#allocation6], 0
    %11 = vsyncpa [#allocation7], 0
    // Predicated region
    $region2: #{tpu_custom_call.1} parent=1 // pred_check
      _
    $region3: #{tpu_custom_call.1} parent=1 // pred_check_branch
      %13 = sbr.rel (0) target = $region5
    $region4: #{tpu_custom_call.1} parent=1 // pred_region
      _
    $region5: #{tpu_custom_call.1} parent=1 // pred_fallthru
      _
    // Predicated region
    $region6: #{tpu_custom_call.1} parent=1 // pred_check
      _
    $region7: #{tpu_custom_call.1} parent=1 // pred_check_branch
      %15 = sbr.rel (0) target = $region9
    $region8: #{tpu_custom_call.1} parent=1 // pred_region
      _
    $region9: #{tpu_custom_call.1} parent=1 // pred_fallthru
      _
    // Predicated region
    $region10: #{tpu_custom_call.1} parent=1 // pred_check
      _
    $region11: #{tpu_custom_call.1} parent=1 // pred_check_branch
      %17 = sbr.rel (0) target = $region13
    $region12: #{tpu_custom_call.1} parent=1 // pred_region
      %19 = vsyncadd [#allocation6], 0
      %s20 = sshll.u32 %s2, 4
      %s21 = int_to_ptr.hbm [resolvable:$true] %s20
      %s22 = sshll.u32 [#allocation5], 4
      %s23 = int_to_ptr.vmem [resolvable:$true] %s22
      %28 = dma.hbm_to_vmem [thread:$0]  %s21, 1024, %s23, [#allocation6], 64, 64, 4
    $region13: #{tpu_custom_call.1} parent=1 // pred_fallthru
      _
    // Predicated region
    $region14: #{tpu_custom_call.1} parent=1 // pred_check
      _
    $region15: #{tpu_custom_call.1} parent=1 // pred_check_branch
      %30 = sbr.rel (0) target = $region17
    $region16: #{tpu_custom_call.1} parent=1 // pred_region
      _
    $region17: #{tpu_custom_call.1} parent=1 // pred_fallthru
      _
    // Predicated region
    $region18: #{tpu_custom_call.1} parent=1 // pred_check
      _
    $region19: #{tpu_custom_call.1} parent=1 // pred_check_branch
      %32 = sbr.rel (0) target = $region21
    $region20: #{tpu_custom_call.1} parent=1 // pred_region
      _
    $region21: #{tpu_custom_call.1} parent=1 // pred_fallthru
      _
    // Predicated region
    $region22: #{tpu_custom_call.1} parent=1 // pred_check
      _
    $region23: #{tpu_custom_call.1} parent=1 // pred_check_branch
      %34 = sbr.rel (0) target = $region25
    $region24: #{tpu_custom_call.1} parent=1 // pred_region
      %36 = dma.done [#allocation6], 1024
    $region25: #{tpu_custom_call.1} parent=1 // pred_fallthru
      _
    %p37 = scmp.eq.s32.totalorder 0, 0
    // Predicated region
    $region26: #{tpu_custom_call.1} parent=1 // pred_check
      %p38 = pneg %p37
    $region27: #{tpu_custom_call.1} parent=1 // pred_check_branch
      %40 = sbr.rel (%p38) target = $region29
    $region28: #{tpu_custom_call.1} parent=1 // pred_region
      %vm41 = vcmask 7168
      %42 = vst.msk [vmem:[#allocation2] sm:$0xff] %vm41, -1e+30
      %43 = vst.msk [vmem:[#allocation3] sm:$0xff] %vm41, 0.0
      %44 = vst.msk [vmem:[#allocation4] sm:$0xff] %vm41, 0.0
    $region29: #{tpu_custom_call.1} parent=1 // pred_fallthru
      _
    %v45 = vld [vmem:[%s0] sm:$0xf]
    %v46 = vld [vmem:[#allocation5] sm:$0xf]
    %v47 = vld [vmem:[#allocation5 + $0x4] sm:$0xf]
    %v48 = vld [vmem:[#allocation5 + $0x8] sm:$0xf]
    %v49 = vld [vmem:[#allocation5 + $0xc] sm:$0xf]
    %v50 = vld [vmem:[#allocation5 + $0x10] sm:$0xf]
    %v51 = vld [vmem:[#allocation5 + $0x14] sm:$0xf]
    %v52 = vld [vmem:[#allocation5 + $0x18] sm:$0xf]
    %v53 = vld [vmem:[#allocation5 + $0x1c] sm:$0xf]
    %v54 = vld [vmem:[#allocation5 + $0x20] sm:$0xf]
    %v55 = vld [vmem:[#allocation5 + $0x24] sm:$0xf]
    %v56 = vld [vmem:[#allocation5 + $0x28] sm:$0xf]
    %v57 = vld [vmem:[#allocation5 + $0x2c] sm:$0xf]
    %v58 = vld [vmem:[#allocation5 + $0x30] sm:$0xf]
    %v59 = vld [vmem:[#allocation5 + $0x34] sm:$0xf]
    %v60 = vld [vmem:[#allocation5 + $0x38] sm:$0xf]
    %v61 = vld [vmem:[#allocation5 + $0x3c] sm:$0xf]
    %v78 = vunpack.c.l.b16 %v46
    %v79 = vunpack.c.l.b16 %v47
    %v80 = vunpack.c.l.b16 %v48
    %v81 = vunpack.c.l.b16 %v49
    %v82 = vunpack.c.l.b16 %v50
    %v83 = vunpack.c.l.b16 %v51
    %v84 = vunpack.c.l.b16 %v52
    %v85 = vunpack.c.l.b16 %v53
    %v86 = vunpack.c.l.b16 %v54
    %v87 = vunpack.c.l.b16 %v55
    %v88 = vunpack.c.l.b16 %v56
    %v89 = vunpack.c.l.b16 %v57
    %v90 = vunpack.c.l.b16 %v58
    %v91 = vunpack.c.l.b16 %v59
    %v92 = vunpack.c.l.b16 %v60
    %v93 = vunpack.c.l.b16 %v61
    %v94 = vpack.c.b16 %v79, %v78
    %v95 = vpack.c.b16 %v81, %v80
    %v96 = vpack.c.b16 %v83, %v82
    %v97 = vpack.c.b16 %v85, %v84
    %v98 = vpack.c.b16 %v87, %v86
    %v99 = vpack.c.b16 %v89, %v88
    %v100 = vpack.c.b16 %v91, %v90
    %v101 = vpack.c.b16 %v93, %v92
    %110 = vmatpush.bf16.msra.mxu0 %v101
    %111 = vmatpush.bf16.msra.mxu0 %v100
    %112 = vmatpush.bf16.msra.mxu0 %v99
    %113 = vmatpush.bf16.msra.mxu0 %v98
    %114 = vmatpush.bf16.msra.mxu0 %v97
    %115 = vmatpush.bf16.msra.mxu0 %v96
    %116 = vmatpush.bf16.msra.mxu0 %v95
    %117 = vmatpush.bf16.msra.mxu0 %v94
    %118 = vmatmul.bf16.gmra.mxu0 %v45
    %v119 = vpop.f32.mrf.mxu0
    %v120 = vadd.f32 0.0, %v119
    %v121 = vpop.f32.mrf.mxu0
    %122 = vdwg.mxu0
    %v123 = vld [vmem:[%s1] sm:$0xff]
    %v124 = vld [vmem:[%s3] sm:$0x1]
    %126 = vset.pattern.permute.xlu0 0
    %127 = vperm.xlu0 %126, %v123
    %v128 = vpop.permute.xlu0 %127
    %v131 = vperm.slane %v124, 0
    %v133 = vmul.f32 %v128, %v131
    %v134 = vmax.f32 %v133, 1e-08
    %v135 = vrcp.pop %v134
    %v136 = vmul.f32 %v134, %v135
    %v137 = vsub.f32 1.0, %v136
    %v138 = vmul.f32 %v135, %v137
    %v139 = vadd.f32 %v135, %v138
    %vm140 = vweird.f32 %v134
    %vm141 = vweird.f32 %v135
    %vm142 = vmor %vm140, %vm141
    %v143 = vsel %vm142, %v135, %v139
    %v144 = vand.u32 2147483647, %v134
    %vm145 = vcmp.eq.f32.partialorder %v144, 8.507059e+37
    %v146 = vand.u32 %v134, 2147483648
    %v147 = vor.u32 1.1754944e-38, %v146
    %v148 = vsel %vm145, %v147, %v143
    %v149 = vmul.f32 %v120, %v148
    %s150 = smul.u32 0, 128
    %v151 = vlaneseq
    %v152 = vand.u32 %v151, 127
    %v153 = vstv %s150
    %v154 = vadd.s32 %v153, %v152
    %v155 = vld [vmem:[%s4] sm:$0xff]
    %156 = vset.pattern.permute.xlu0 0
    %157 = vperm.xlu0 %156, %v155
    %v158 = vpop.permute.xlu0 %157
    %vm159 = vcmp.eq.s32.totalorder %v154, %v158
    %v160 = vmul.f32 %v149, 30.0
    %v161 = vsel %vm159, 12.0, 0.0
    %v162 = vsub.f32 %v160, %v161
    %vm163 = vcmp.lt.s32.totalorder %v154, 16
    %v164 = vsel %vm163, %v162, -1e+30
    %v165 = vld [vmem:[#allocation2] sm:$0xff]
    %166 = vmax.xlane.f32.xlu0 %v164
    %v167 = vpop.xlane.xlu0 %166
    %v168 = vmax.f32 %v165, %v167
    %v169 = vsub.f32 %v165, %v168
    %v170 = vmul.f32 %v169, 1.442695
    %v171 = vpow.pop %v170
    %v172 = vld [vmem:[#allocation3] sm:$0xff]
    %v173 = vmul.f32 %v171, %v172
    %175 = vset.pattern.permute.xlu0 0
    %176 = vperm.xlu0 %175, %v168
    %v177 = vpop.permute.xlu0 %176
    %v179 = vsub.f32 %v164, %v177
    %v180 = vmul.f32 %v179, 1.442695
    %v181 = vpow.pop %v180
    %182 = vadd.xlane.f32.xlu0 %v181
    %v183 = vpop.xlane.xlu0 %182
    %v184 = vadd.f32 %v173, %v183
    %vm185 = vcmask 7168
    %186 = vst.msk [vmem:[#allocation3] sm:$0xff] %vm185, %v184
    %187 = vst.msk [vmem:[#allocation2] sm:$0xff] %vm185, %v168
    %v188 = vld [vmem:[#allocation4] sm:$0xff]
    %v189 = vsel %vm159, %v164, 0.0
    %190 = vadd.xlane.f32.xlu0 %v189
    %v191 = vpop.xlane.xlu0 %190
    %v192 = vadd.f32 %v188, %v191
    %193 = vst.msk [vmem:[#allocation4] sm:$0xff] %vm185, %v192
    // Predicated region
    $region30: #{tpu_custom_call.1} parent=1 // pred_check
      %p194 = pneg %p37
    $region31: #{tpu_custom_call.1} parent=1 // pred_check_branch
      %196 = sbr.rel (%p194) target = $region33
    $region32: #{tpu_custom_call.1} parent=1 // pred_region
      %v197 = vld [vmem:[#allocation2] sm:$0xff]
      %v198 = vld [vmem:[#allocation3] sm:$0xff]
      %v199 = vlog2.pop %v198
      %v200 = vmul.f32 %v199, 0.6931472
      %v201 = vadd.f32 %v197, %v200
      %v202 = vld [vmem:[#allocation4] sm:$0xff]
      %v203 = vsub.f32 %v201, %v202
      %205 = vset.pattern.permute.xlu0 0
      %206 = vperm.xlu0 %205, %v203
      %v207 = vpop.permute.xlu0 %206
      %209 = vst [vmem:[#allocation8] sm:$0xff] %v207
    $region33: #{tpu_custom_call.1} parent=1 // pred_fallthru
      _
    // Predicated region
    $region34: #{tpu_custom_call.1} parent=1 // pred_check
      _
    $region35: #{tpu_custom_call.1} parent=1 // pred_check_branch
      %211 = sbr.rel (0) target = $region37
    $region36: #{tpu_custom_call.1} parent=1 // pred_region
      %213 = vsyncadd [#allocation7], 0
      %s215 = sshll.u32 [#allocation8], 4
      %s216 = int_to_ptr.vmem [resolvable:$true] %s215
      %s217 = sshll.u32 %s5, 4
      %s218 = int_to_ptr.hbm [resolvable:$true] %s217
      %220 = dma.vmem_to_hbm [thread:$0]  %s216, 128, %s218, [#allocation7]
    $region37: #{tpu_custom_call.1} parent=1 // pred_fallthru
      _
    // Predicated region
    $region38: #{tpu_custom_call.1} parent=1 // pred_check
      _
    $region39: #{tpu_custom_call.1} parent=1 // pred_check_branch
      %222 = sbr.rel (0) target = $region41
    $region40: #{tpu_custom_call.1} parent=1 // pred_region
      %224 = dma.done [#allocation7], 128
    $region41: #{tpu_custom_call.1} parent=1 // pred_fallthru
      _
    %225 = vsyncpa [#allocation6], 1
    %226 = vsyncpa [#allocation7], 1

</llo_original>
